<compile_context>
chip_gen: v7x
topology: tpu7x:2x2x1
jax: 0.10.0
libtpu: 0.0.40
codegen_flags: <defaults>
</compile_context>

<pallas_src>
import functools
import math

import jax
import jax.numpy as jnp
from jax.experimental import pallas as pl
from jax.experimental.pallas import tpu as pltpu


def _round_up(x, m):
    return ((x + m - 1) // m) * m


def _mlp_kernel(x_ref, w_ref, b_ref, out_ref, *, n_layers):
    """Fused forward: (n_layers-1) x (Linear + ReLU) -> Linear -> softmax.

    x_ref:   (TM, D)    bf16  activation tile (feature-padded with zeros to D lanes)
    w_ref:   (L, D, D)  bf16  packed, zero-padded weights, (in, out) layout
    b_ref:   (Lpad, D)  f32   packed biases; last layer's padded lanes hold -1e30
    out_ref: (TM, D)    bf16  lane-dense softmax output (padded lanes are exactly 0)
    """
    h = x_ref[...]                                              # (TM, D) bf16

    # Hidden layers: bf16 matmul on the MXU, f32 accumulate, f32 bias + ReLU,
    # cast back to bf16 only as the next matmul operand.
    for l in range(n_layers - 1):
        y = jnp.dot(h, w_ref[l], preferred_element_type=jnp.float32)
        h = jnp.maximum(y + b_ref[l], 0.0).astype(jnp.bfloat16)

    # Final linear (no ReLU).  Padded output lanes carry bias = -1e30, so after the
    # max-subtraction exp() underflows to exactly 0 -- no explicit lane mask needed.
    logits = jnp.dot(h, w_ref[n_layers - 1],
                     preferred_element_type=jnp.float32) + b_ref[n_layers - 1]

    m = jnp.max(logits, axis=-1, keepdims=True)
    e = jnp.exp(logits - m)
    denom = jnp.sum(e, axis=-1, keepdims=True)
    out_ref[...] = (e / denom).astype(out_ref.dtype)            # exact normalization


def _choose_tiling(batch, tm_max=4096, min_split_rows=256):
    """Pick (tile_rows, padded_batch).  Tiles are multiples of 16 rows (bf16 packing).

    - cdiv-based sizing so awkward batches don't pad up to ~2x.
    - >=2 (even) tiles once the batch is big enough, so v7x's two TensorCores both
      get work and the activation DMA has something to double-buffer against.
    """
    b16 = _round_up(batch, 16)
    n_tiles = pl.cdiv(b16, tm_max)
    if b16 >= min_split_rows:
        n_tiles = max(n_tiles, 2)
    if n_tiles > 1 and n_tiles % 2:
        n_tiles += 1
    tm = _round_up(pl.cdiv(b16, n_tiles), 16)
    return tm, tm * n_tiles


def mlp_mach4_forward(x, w_stack, b_stack, out_valid, tm_max=4096):
    """x: (B, input_size) f32.  w_stack: (L, D, D) bf16.  b_stack: (Lpad, D) f32.

    Returns (B, out_valid) f32 softmax probabilities (module output dtype).
    """
    B, din = x.shape
    L, D, _ = w_stack.shape

    tm, b_pad = _choose_tiling(B, tm_max)
    n_tiles = b_pad // tm

    # Zero-pad batch rows / feature lanes; cast once to bf16 (the matmul-operand dtype).
    x_pad = jnp.zeros((b_pad, D), jnp.bfloat16).at[:B, :din].set(x.astype(jnp.bfloat16))

    kernel = functools.partial(_mlp_kernel, n_layers=L)

    cost = pl.CostEstimate(
        flops=2 * b_pad * D * D * L,
        transcendentals=b_pad * D,                         # softmax exp
        bytes_accessed=(b_pad * D * 2                      # bf16 activations in
                        + b_pad * D * 2                    # bf16 probabilities out
                        + w_stack.size * 2                 # bf16 weights
                        + b_stack.size * 4),               # f32 biases
    )

    out = pl.pallas_call(
        kernel,
        out_shape=jax.ShapeDtypeStruct((b_pad, D), jnp.bfloat16),
        grid=(n_tiles,),
        in_specs=[
            pl.BlockSpec((tm, D), lambda i: (i, 0)),            # activation tile (streams)
            pl.BlockSpec(w_stack.shape, lambda i: (0, 0, 0)),   # weights: VMEM-resident
            pl.BlockSpec(b_stack.shape, lambda i: (0, 0)),      # biases:  VMEM-resident
        ],
        out_specs=pl.BlockSpec((tm, D), lambda i: (i, 0)),      # lane-dense bf16 store
        compiler_params=pltpu.CompilerParams(
            dimension_semantics=("parallel",),    # megacore split across v7x's 2 TCs
            vmem_limit_bytes=32 * 1024 * 1024,    # explicit budget; safe on v5e/v6e/v7x
        ),
        cost_estimate=cost,
    )(x_pad, w_stack, b_stack)

    return out[:B, :out_valid].astype(jnp.float32)


def init_params(key, dims):
    """Deterministic init mimicking the PyTorch module.

    dims = [input_size, h1, ..., h6, 2]
    Weights: explicit kaiming_uniform_(a=0) -> U(-sqrt(6/fan_in), sqrt(6/fan_in)),
             stored transposed as (in, out) for the x @ W kernel layout.
    Biases:  nn.Linear default -> U(-1/sqrt(fan_in), 1/sqrt(fan_in)).
    """
    params = []
    for i in range(len(dims) - 1):
        fan_in, fan_out = dims[i], dims[i + 1]
        key, kw, kb = jax.random.split(key, 3)
        w_bound = math.sqrt(6.0 / fan_in)
        b_bound = 1.0 / math.sqrt(fan_in)
        w_t = jax.random.uniform(kw, (fan_in, fan_out), jnp.float32,
                                 minval=-w_bound, maxval=w_bound)
        b = jax.random.uniform(kb, (fan_out,), jnp.float32,
                               minval=-b_bound, maxval=b_bound)
        params.append((w_t, b))
    return params


def pack_params(params, d_pad, out_valid):
    """Pack per-layer (W_t, b) into one bf16 weight stack and one f32 bias slab.

    Padded rows/cols are zero so padded lanes stay exactly zero through every ReLU.
    The last layer's padded bias lanes are set to -1e30, baking the softmax lane mask
    into the bias add (no iota/where needed in the kernel).
    """
    L = len(params)
    w_stack = jnp.zeros((L, d_pad, d_pad), jnp.bfloat16)
    b_stack = jnp.zeros((_round_up(L, 8), d_pad), jnp.float32)
    for l, (w, b) in enumerate(params):
        din, dout = w.shape
        w_stack = w_stack.at[l, :din, :dout].set(w.astype(jnp.bfloat16))
        b_stack = b_stack.at[l, :dout].set(b.astype(jnp.float32))
    b_stack = b_stack.at[L - 1, out_valid:].set(-1e30)
    return w_stack, b_stack


def reference_forward(x, params):
    """Pure-JAX reference using the same bf16-operand / f32-accumulate math."""
    h = x
    for (w, b) in params[:-1]:
        y = jnp.dot(h.astype(jnp.bfloat16), w.astype(jnp.bfloat16),
                    preferred_element_type=jnp.float32) + b
        h = jnp.maximum(y, 0.0)
    w, b = params[-1]
    logits = jnp.dot(h.astype(jnp.bfloat16), w.astype(jnp.bfloat16),
                     preferred_element_type=jnp.float32) + b
    return jax.nn.softmax(logits, axis=1)


if __name__ == "__main__":
    key = jax.random.PRNGKey(0)
    key, kx = jax.random.split(key)

    # Small shapes consistent with the module: batch=8, input=32, six hiddens, output=2.
    # (At this size the call is launch/DMA-latency bound -- that's expected; the tiling
    #  logic above only kicks in for realistic batches.)
    batch = 8
    dims = [32, 64, 64, 32, 32, 16, 16, 2]

    x = jax.random.normal(kx, (batch, dims[0]), jnp.float32)
    params = init_params(key, dims)

    d_pad = _round_up(max(dims), 128)        # common 128-lane padded feature width
    w_stack, b_stack = pack_params(params, d_pad, out_valid=dims[-1])

    out = mlp_mach4_forward(x, w_stack, b_stack, out_valid=dims[-1])
    out = jax.block_until_ready(out)

    ref = reference_forward(x, params)

    assert out.shape == (batch, dims[-1])
    assert bool(jnp.all(jnp.isfinite(out)))
    # bf16 output quantization + bf16 matmul operands: small tolerance
    assert jnp.allclose(jnp.sum(out, axis=1), 1.0, atol=1e-2)
    assert jnp.allclose(out, ref, atol=1e-2, rtol=1e-2)

    print("KERNEL_OK")
</pallas_src>

<mosaic_0001>
module attributes {stable_mosaic.version = 11 : i64} {
  func.func @_mlp_kernel(%arg0: i32, %arg1: memref<16x128xbf16, #tpu.memory_space<vmem>>, %arg2: memref<7x128x128xbf16, #tpu.memory_space<vmem>>, %arg3: memref<8x128xf32, #tpu.memory_space<vmem>>, %arg4: memref<16x128xbf16, #tpu.memory_space<vmem>>) attributes {dimension_semantics = [#tpu.dimension_semantics<parallel>], iteration_bounds = array<i64: 1>, scalar_prefetch = 0 : i64, scratch_operands = 0 : i64, tpu.core_type = #tpu.core_type<tc>, window_params = [{transform_indices = @transform_0, window_bounds = array<i64: 16, 128>}, {pipeline_mode = #tpu.pipeline_mode<synchronous>, transform_indices = @transform_1, window_bounds = array<i64: 7, 128, 128>}, {pipeline_mode = #tpu.pipeline_mode<synchronous>, transform_indices = @transform_2, window_bounds = array<i64: 8, 128>}, {transform_indices = @transform_3, window_bounds = array<i64: 16, 128>}]} {
    %c0 = arith.constant 0 : index
    %c0_0 = arith.constant 0 : index
    %0 = vector.load %arg1[%c0, %c0_0] : memref<16x128xbf16, #tpu.memory_space<vmem>>, vector<16x128xbf16>
    %c0_1 = arith.constant 0 : index
    %c0_2 = arith.constant 0 : index
    %c0_3 = arith.constant 0 : index
    %1 = vector.load %arg2[%c0_1, %c0_2, %c0_3] : memref<7x128x128xbf16, #tpu.memory_space<vmem>>, vector<1x128x128xbf16>
    %2 = vector.shape_cast %1 : vector<1x128x128xbf16> to vector<128x128xbf16>
    %cst = arith.constant dense<0.000000e+00> : vector<16x128xf32>
    %3 = tpu.matmul %0, %2, %cst {dimension_numbers = #tpu.dot_dimension_numbers<[1], [0], [0], [1], [0, 0, 1, 1], [], []>} : vector<16x128xbf16>, vector<128x128xbf16>, vector<16x128xf32> -> vector<16x128xf32>
    %c0_4 = arith.constant 0 : index
    %c0_5 = arith.constant 0 : index
    %4 = vector.load %arg3[%c0_4, %c0_5] : memref<8x128xf32, #tpu.memory_space<vmem>>, vector<1x128xf32>
    %5 = vector.shape_cast %4 : vector<1x128xf32> to vector<128xf32>
    %6 = vector.shape_cast %5 : vector<128xf32> to vector<1x128xf32>
    %7 = vector.broadcast %6 : vector<1x128xf32> to vector<16x128xf32>
    %8 = arith.addf %3, %7 : vector<16x128xf32>
    %cst_6 = arith.constant 0.000000e+00 : f32
    %9 = vector.broadcast %cst_6 : f32 to vector<16x128xf32>
    %10 = arith.maximumf %8, %9 : vector<16x128xf32>
    %11 = arith.truncf %10 : vector<16x128xf32> to vector<16x128xbf16>
    %c1 = arith.constant 1 : index
    %c0_7 = arith.constant 0 : index
    %c0_8 = arith.constant 0 : index
    %12 = vector.load %arg2[%c1, %c0_7, %c0_8] : memref<7x128x128xbf16, #tpu.memory_space<vmem>>, vector<1x128x128xbf16>
    %13 = vector.shape_cast %12 : vector<1x128x128xbf16> to vector<128x128xbf16>
    %cst_9 = arith.constant dense<0.000000e+00> : vector<16x128xf32>
    %14 = tpu.matmul %11, %13, %cst_9 {dimension_numbers = #tpu.dot_dimension_numbers<[1], [0], [0], [1], [0, 0, 1, 1], [], []>} : vector<16x128xbf16>, vector<128x128xbf16>, vector<16x128xf32> -> vector<16x128xf32>
    %c1_10 = arith.constant 1 : index
    %c0_11 = arith.constant 0 : index
    %15 = vector.load %arg3[%c1_10, %c0_11] : memref<8x128xf32, #tpu.memory_space<vmem>>, vector<1x128xf32>
    %16 = vector.shape_cast %15 : vector<1x128xf32> to vector<128xf32>
    %17 = vector.shape_cast %16 : vector<128xf32> to vector<1x128xf32>
    %18 = vector.broadcast %17 : vector<1x128xf32> to vector<16x128xf32>
    %19 = arith.addf %14, %18 : vector<16x128xf32>
    %cst_12 = arith.constant 0.000000e+00 : f32
    %20 = vector.broadcast %cst_12 : f32 to vector<16x128xf32>
    %21 = arith.maximumf %19, %20 : vector<16x128xf32>
    %22 = arith.truncf %21 : vector<16x128xf32> to vector<16x128xbf16>
    %c2 = arith.constant 2 : index
    %c0_13 = arith.constant 0 : index
    %c0_14 = arith.constant 0 : index
    %23 = vector.load %arg2[%c2, %c0_13, %c0_14] : memref<7x128x128xbf16, #tpu.memory_space<vmem>>, vector<1x128x128xbf16>
    %24 = vector.shape_cast %23 : vector<1x128x128xbf16> to vector<128x128xbf16>
    %cst_15 = arith.constant dense<0.000000e+00> : vector<16x128xf32>
    %25 = tpu.matmul %22, %24, %cst_15 {dimension_numbers = #tpu.dot_dimension_numbers<[1], [0], [0], [1], [0, 0, 1, 1], [], []>} : vector<16x128xbf16>, vector<128x128xbf16>, vector<16x128xf32> -> vector<16x128xf32>
    %c2_16 = arith.constant 2 : index
    %c0_17 = arith.constant 0 : index
    %26 = vector.load %arg3[%c2_16, %c0_17] : memref<8x128xf32, #tpu.memory_space<vmem>>, vector<1x128xf32>
    %27 = vector.shape_cast %26 : vector<1x128xf32> to vector<128xf32>
    %28 = vector.shape_cast %27 : vector<128xf32> to vector<1x128xf32>
    %29 = vector.broadcast %28 : vector<1x128xf32> to vector<16x128xf32>
    %30 = arith.addf %25, %29 : vector<16x128xf32>
    %cst_18 = arith.constant 0.000000e+00 : f32
    %31 = vector.broadcast %cst_18 : f32 to vector<16x128xf32>
    %32 = arith.maximumf %30, %31 : vector<16x128xf32>
    %33 = arith.truncf %32 : vector<16x128xf32> to vector<16x128xbf16>
    %c3 = arith.constant 3 : index
    %c0_19 = arith.constant 0 : index
    %c0_20 = arith.constant 0 : index
    %34 = vector.load %arg2[%c3, %c0_19, %c0_20] : memref<7x128x128xbf16, #tpu.memory_space<vmem>>, vector<1x128x128xbf16>
    %35 = vector.shape_cast %34 : vector<1x128x128xbf16> to vector<128x128xbf16>
    %cst_21 = arith.constant dense<0.000000e+00> : vector<16x128xf32>
    %36 = tpu.matmul %33, %35, %cst_21 {dimension_numbers = #tpu.dot_dimension_numbers<[1], [0], [0], [1], [0, 0, 1, 1], [], []>} : vector<16x128xbf16>, vector<128x128xbf16>, vector<16x128xf32> -> vector<16x128xf32>
    %c3_22 = arith.constant 3 : index
    %c0_23 = arith.constant 0 : index
    %37 = vector.load %arg3[%c3_22, %c0_23] : memref<8x128xf32, #tpu.memory_space<vmem>>, vector<1x128xf32>
    %38 = vector.shape_cast %37 : vector<1x128xf32> to vector<128xf32>
    %39 = vector.shape_cast %38 : vector<128xf32> to vector<1x128xf32>
    %40 = vector.broadcast %39 : vector<1x128xf32> to vector<16x128xf32>
    %41 = arith.addf %36, %40 : vector<16x128xf32>
    %cst_24 = arith.constant 0.000000e+00 : f32
    %42 = vector.broadcast %cst_24 : f32 to vector<16x128xf32>
    %43 = arith.maximumf %41, %42 : vector<16x128xf32>
    %44 = arith.truncf %43 : vector<16x128xf32> to vector<16x128xbf16>
    %c4 = arith.constant 4 : index
    %c0_25 = arith.constant 0 : index
    %c0_26 = arith.constant 0 : index
    %45 = vector.load %arg2[%c4, %c0_25, %c0_26] : memref<7x128x128xbf16, #tpu.memory_space<vmem>>, vector<1x128x128xbf16>
    %46 = vector.shape_cast %45 : vector<1x128x128xbf16> to vector<128x128xbf16>
    %cst_27 = arith.constant dense<0.000000e+00> : vector<16x128xf32>
    %47 = tpu.matmul %44, %46, %cst_27 {dimension_numbers = #tpu.dot_dimension_numbers<[1], [0], [0], [1], [0, 0, 1, 1], [], []>} : vector<16x128xbf16>, vector<128x128xbf16>, vector<16x128xf32> -> vector<16x128xf32>
    %c4_28 = arith.constant 4 : index
    %c0_29 = arith.constant 0 : index
    %48 = vector.load %arg3[%c4_28, %c0_29] : memref<8x128xf32, #tpu.memory_space<vmem>>, vector<1x128xf32>
    %49 = vector.shape_cast %48 : vector<1x128xf32> to vector<128xf32>
    %50 = vector.shape_cast %49 : vector<128xf32> to vector<1x128xf32>
    %51 = vector.broadcast %50 : vector<1x128xf32> to vector<16x128xf32>
    %52 = arith.addf %47, %51 : vector<16x128xf32>
    %cst_30 = arith.constant 0.000000e+00 : f32
    %53 = vector.broadcast %cst_30 : f32 to vector<16x128xf32>
    %54 = arith.maximumf %52, %53 : vector<16x128xf32>
    %55 = arith.truncf %54 : vector<16x128xf32> to vector<16x128xbf16>
    %c5 = arith.constant 5 : index
    %c0_31 = arith.constant 0 : index
    %c0_32 = arith.constant 0 : index
    %56 = vector.load %arg2[%c5, %c0_31, %c0_32] : memref<7x128x128xbf16, #tpu.memory_space<vmem>>, vector<1x128x128xbf16>
    %57 = vector.shape_cast %56 : vector<1x128x128xbf16> to vector<128x128xbf16>
    %cst_33 = arith.constant dense<0.000000e+00> : vector<16x128xf32>
    %58 = tpu.matmul %55, %57, %cst_33 {dimension_numbers = #tpu.dot_dimension_numbers<[1], [0], [0], [1], [0, 0, 1, 1], [], []>} : vector<16x128xbf16>, vector<128x128xbf16>, vector<16x128xf32> -> vector<16x128xf32>
    %c5_34 = arith.constant 5 : index
    %c0_35 = arith.constant 0 : index
    %59 = vector.load %arg3[%c5_34, %c0_35] : memref<8x128xf32, #tpu.memory_space<vmem>>, vector<1x128xf32>
    %60 = vector.shape_cast %59 : vector<1x128xf32> to vector<128xf32>
    %61 = vector.shape_cast %60 : vector<128xf32> to vector<1x128xf32>
    %62 = vector.broadcast %61 : vector<1x128xf32> to vector<16x128xf32>
    %63 = arith.addf %58, %62 : vector<16x128xf32>
    %cst_36 = arith.constant 0.000000e+00 : f32
    %64 = vector.broadcast %cst_36 : f32 to vector<16x128xf32>
    %65 = arith.maximumf %63, %64 : vector<16x128xf32>
    %66 = arith.truncf %65 : vector<16x128xf32> to vector<16x128xbf16>
    %c6 = arith.constant 6 : index
    %c0_37 = arith.constant 0 : index
    %c0_38 = arith.constant 0 : index
    %67 = vector.load %arg2[%c6, %c0_37, %c0_38] : memref<7x128x128xbf16, #tpu.memory_space<vmem>>, vector<1x128x128xbf16>
    %68 = vector.shape_cast %67 : vector<1x128x128xbf16> to vector<128x128xbf16>
    %cst_39 = arith.constant dense<0.000000e+00> : vector<16x128xf32>
    %69 = tpu.matmul %66, %68, %cst_39 {dimension_numbers = #tpu.dot_dimension_numbers<[1], [0], [0], [1], [0, 0, 1, 1], [], []>} : vector<16x128xbf16>, vector<128x128xbf16>, vector<16x128xf32> -> vector<16x128xf32>
    %c6_40 = arith.constant 6 : index
    %c0_41 = arith.constant 0 : index
    %70 = vector.load %arg3[%c6_40, %c0_41] : memref<8x128xf32, #tpu.memory_space<vmem>>, vector<1x128xf32>
    %71 = vector.shape_cast %70 : vector<1x128xf32> to vector<128xf32>
    %72 = vector.shape_cast %71 : vector<128xf32> to vector<1x128xf32>
    %73 = vector.broadcast %72 : vector<1x128xf32> to vector<16x128xf32>
    %74 = arith.addf %69, %73 : vector<16x128xf32>
    %cst_42 = arith.constant dense<0xFF800000> : vector<16xf32>
    %75 = vector.multi_reduction <maximumf>, %74, %cst_42 [1] : vector<16x128xf32> to vector<16xf32>
    %76 = vector.shape_cast %75 : vector<16xf32> to vector<16x1xf32>
    %77 = vector.broadcast %76 : vector<16x1xf32> to vector<16x128xf32>
    %78 = arith.subf %74, %77 : vector<16x128xf32>
    %79 = math.exp %78 : vector<16x128xf32>
    %cst_43 = arith.constant dense<0.000000e+00> : vector<16xf32>
    %80 = vector.multi_reduction <add>, %79, %cst_43 [1] : vector<16x128xf32> to vector<16xf32>
    %81 = vector.shape_cast %80 : vector<16xf32> to vector<16x1xf32>
    %82 = vector.broadcast %81 : vector<16x1xf32> to vector<16x128xf32>
    %83 = arith.divf %79, %82 : vector<16x128xf32>
    %84 = arith.truncf %83 : vector<16x128xf32> to vector<16x128xbf16>
    %c0_44 = arith.constant 0 : index
    %c0_45 = arith.constant 0 : index
    %85 = vector.load %arg4[%c0_44, %c0_45] : memref<16x128xbf16, #tpu.memory_space<vmem>>, vector<16x128xbf16>
    tpu.vector_store %arg4[%c0_44, %c0_45], %84 {strides = array<i32>} : memref<16x128xbf16, #tpu.memory_space<vmem>>, vector<16x128xbf16>,
    return
  }
  func.func @transform_0(%arg0: i32) -> (i32, i32) {
    %c0_i32 = arith.constant 0 : i32
    %c0_i32_0 = arith.constant 0 : i32
    return %arg0, %c0_i32 : i32, i32
  }
  func.func @transform_1(%arg0: i32) -> (i32, i32, i32) {
    %c0_i32 = arith.constant 0 : i32
    %c0_i32_0 = arith.constant 0 : i32
    %c0_i32_1 = arith.constant 0 : i32
    %c0_i32_2 = arith.constant 0 : i32
    return %c0_i32, %c0_i32_0, %c0_i32_1 : i32, i32, i32
  }
  func.func @transform_2(%arg0: i32) -> (i32, i32) {
    %c0_i32 = arith.constant 0 : i32
    %c0_i32_0 = arith.constant 0 : i32
    %c0_i32_1 = arith.constant 0 : i32
    return %c0_i32, %c0_i32_0 : i32, i32
  }
  func.func @transform_3(%arg0: i32) -> (i32, i32) {
    %c0_i32 = arith.constant 0 : i32
    %c0_i32_0 = arith.constant 0 : i32
    return %arg0, %c0_i32 : i32, i32
  }
}

</mosaic_0001>

<llo_original>
// kernel: tpu_custom_call.1
$region0: #{tpu_custom_call.1}
  #allocation0 [shape = 'u32[]', space=smem, size = 0x4, offset = 0x4, fixed_abs, tag = 'smem constant byte address 0x4 - core index']
  #allocation1 [shape = 'u32[144,128]{1,0:T(1,128)}', space=vmem, size = 0x12000, scoped, tag = 'internal scratch']
  %s0 = inlined_call_operand.hbm [shape: bf16[16,128], index: 0, kind: input, shape index: {}]
  %s1 = inlined_call_operand.hbm [shape: bf16[7,128,128], index: 1, kind: input, shape index: {}]
  %s2 = inlined_call_operand.hbm [shape: f32[8,128], index: 2, kind: input, shape index: {}]
  %s3 = inlined_call_operand.hbm [shape: bf16[16,128], index: 3, kind: output, shape index: {}]
  %s4 = sld [smem:[#allocation0]]
  $region34: #{tpu_custom_call.1} parent=0
    _
  %s6 = ssub.s32 1, %s4
  %s7 = scalar_select 0, %s6, %s4
  $region1: #{tpu_custom_call.1} parent=0
    #allocation2 [shape = 'u8[4096]{0}', space=vmem, size = 0x1000, scoped, tag = 'input window, operand 0, single buffered']
    #allocation3 [shape = 's32[1]{0}', space=sflag, size = 0x4, scoped, tag = 'scoped memory for tpu_custom_call.1']
    #allocation4 [shape = 's32[1]{0}', space=sflag, size = 0x4, scoped, tag = 'scoped memory for tpu_custom_call.1']
    #allocation5 [shape = 'u8[229376]{0}', space=vmem, size = 0x38000, scoped, tag = 'input window, operand 1, single buffered']
    #allocation6 [shape = 's32[1]{0}', space=sflag, size = 0x4, scoped, tag = 'scoped memory for tpu_custom_call.1']
    #allocation7 [shape = 'u8[4096]{0}', space=vmem, size = 0x1000, scoped, tag = 'input window, operand 2, single buffered']
    #allocation8 [shape = 'u8[4096]{0}', space=vmem, size = 0x1000, scoped, tag = 'output window, operand 0, single buffered']
    %8 = vsyncpa [#allocation3], 0
    %9 = vsyncpa [#allocation6], 0
    %10 = vsyncpa [#allocation4], 0
    // Predicated region
    $region2: #{tpu_custom_call.1} parent=1 // pred_check
      _
    $region3: #{tpu_custom_call.1} parent=1 // pred_check_branch
      %12 = sbr.rel (0) target = $region5
    $region4: #{tpu_custom_call.1} parent=1 // pred_region
      %s14 = ssub.s32 128, 128
      %15 = vsyncadd [#allocation3], %s14
      %s16 = sshll.u32 [#allocation2], 4
      %s17 = int_to_ptr.vmem [resolvable:$true] %s16
      %22 = dma.hbm_to_vmem [thread:$0]  %s0, 128, %s17, [#allocation3], 64, 64, 4
    $region5: #{tpu_custom_call.1} parent=1 // pred_fallthru
      _
    // Predicated region
    $region6: #{tpu_custom_call.1} parent=1 // pred_check
      _
    $region7: #{tpu_custom_call.1} parent=1 // pred_check_branch
      %24 = sbr.rel (0) target = $region9
    $region8: #{tpu_custom_call.1} parent=1 // pred_region
      %s26 = ssub.s32 7168, 7168
      %27 = vsyncadd [#allocation6], %s26
      %s28 = sshll.u32 [#allocation5], 4
      %s29 = int_to_ptr.vmem [resolvable:$true] %s28
      %34 = dma.hbm_to_vmem [thread:$0]  %s1, 7168, %s29, [#allocation6], 64, 64, 4
    $region9: #{tpu_custom_call.1} parent=1 // pred_fallthru
      _
    // Predicated region
    $region10: #{tpu_custom_call.1} parent=1 // pred_check
      _
    $region11: #{tpu_custom_call.1} parent=1 // pred_check_branch
      %36 = sbr.rel (0) target = $region13
    $region12: #{tpu_custom_call.1} parent=1 // pred_region
      %s38 = ssub.s32 128, 128
      %39 = vsyncadd [#allocation6], %s38
      %s41 = sshll.u32 [#allocation7], 4
      %s42 = int_to_ptr.vmem [resolvable:$true] %s41
      %44 = dma.hbm_to_vmem [thread:$0]  %s2, 128, %s42, [#allocation6]
    $region13: #{tpu_custom_call.1} parent=1 // pred_fallthru
      _
    // Predicated region
    $region14: #{tpu_custom_call.1} parent=1 // pred_check
      _
    $region15: #{tpu_custom_call.1} parent=1 // pred_check_branch
      %46 = sbr.rel (0) target = $region17
    $region16: #{tpu_custom_call.1} parent=1 // pred_region
      %47 = dma.done [#allocation3], 128
    $region17: #{tpu_custom_call.1} parent=1 // pred_fallthru
      _
    // Predicated region
    $region18: #{tpu_custom_call.1} parent=1 // pred_check
      _
    $region19: #{tpu_custom_call.1} parent=1 // pred_check_branch
      %49 = sbr.rel (0) target = $region21
    $region20: #{tpu_custom_call.1} parent=1 // pred_region
      %50 = dma.done [#allocation6], 7168
    $region21: #{tpu_custom_call.1} parent=1 // pred_fallthru
      _
    // Predicated region
    $region22: #{tpu_custom_call.1} parent=1 // pred_check
      _
    $region23: #{tpu_custom_call.1} parent=1 // pred_check_branch
      %52 = sbr.rel (0) target = $region25
    $region24: #{tpu_custom_call.1} parent=1 // pred_region
      %53 = dma.done [#allocation6], 128
    $region25: #{tpu_custom_call.1} parent=1 // pred_fallthru
      _
    %v55 = vld [vmem:[#allocation2] sm:$0xf]
    %v56 = vld [vmem:[#allocation2 + $0x4] sm:$0xf]
    %v57 = vld [vmem:[#allocation5] sm:$0xf]
    %v58 = vld [vmem:[#allocation5 + $0x4] sm:$0xf]
    %v59 = vld [vmem:[#allocation5 + $0x8] sm:$0xf]
    %v60 = vld [vmem:[#allocation5 + $0xc] sm:$0xf]
    %v61 = vld [vmem:[#allocation5 + $0x10] sm:$0xf]
    %v62 = vld [vmem:[#allocation5 + $0x14] sm:$0xf]
    %v63 = vld [vmem:[#allocation5 + $0x18] sm:$0xf]
    %v64 = vld [vmem:[#allocation5 + $0x1c] sm:$0xf]
    %v65 = vld [vmem:[#allocation5 + $0x20] sm:$0xf]
    %v66 = vld [vmem:[#allocation5 + $0x24] sm:$0xf]
    %v67 = vld [vmem:[#allocation5 + $0x28] sm:$0xf]
    %v68 = vld [vmem:[#allocation5 + $0x2c] sm:$0xf]
    %v69 = vld [vmem:[#allocation5 + $0x30] sm:$0xf]
    %v70 = vld [vmem:[#allocation5 + $0x34] sm:$0xf]
    %v71 = vld [vmem:[#allocation5 + $0x38] sm:$0xf]
    %v72 = vld [vmem:[#allocation5 + $0x3c] sm:$0xf]
    %v73 = vld [vmem:[#allocation7] sm:$0x1]
    %v74 = vlaneseq
    %v75 = vshrl.u32 %v74, 7
    %v76 = vsub.s32 0, %v75
    %v77 = vrot.slane %v73, %v76
    %v80 = vunpack.c.l.b16 %v55
    %v81 = vunpack.c.l.b16 %v56
    %v82 = vpack.c.b16 %v81, %v80
    %v100 = vunpack.c.l.b16 %v57
    %v101 = vunpack.c.l.b16 %v58
    %v102 = vunpack.c.l.b16 %v59
    %v103 = vunpack.c.l.b16 %v60
    %v104 = vunpack.c.l.b16 %v61
    %v105 = vunpack.c.l.b16 %v62
    %v106 = vunpack.c.l.b16 %v63
    %v107 = vunpack.c.l.b16 %v64
    %v108 = vunpack.c.l.b16 %v65
    %v109 = vunpack.c.l.b16 %v66
    %v110 = vunpack.c.l.b16 %v67
    %v111 = vunpack.c.l.b16 %v68
    %v112 = vunpack.c.l.b16 %v69
    %v113 = vunpack.c.l.b16 %v70
    %v114 = vunpack.c.l.b16 %v71
    %v115 = vunpack.c.l.b16 %v72
    %v116 = vpack.c.b16 %v101, %v100
    %v117 = vpack.c.b16 %v103, %v102
    %v118 = vpack.c.b16 %v105, %v104
    %v119 = vpack.c.b16 %v107, %v106
    %v120 = vpack.c.b16 %v109, %v108
    %v121 = vpack.c.b16 %v111, %v110
    %v122 = vpack.c.b16 %v113, %v112
    %v123 = vpack.c.b16 %v115, %v114
    %132 = vmatprep.subr.bf16.mxu0 0
    %133 = vmatpush1.bf16.msra.mxu0 %v116
    %134 = vmatprep.subr.bf16.mxu0 0
    %135 = vmatpush1.bf16.msra.mxu0 %v117
    %136 = vmatprep.subr.bf16.mxu0 0
    %137 = vmatpush1.bf16.msra.mxu0 %v118
    %138 = vmatprep.subr.bf16.mxu0 0
    %139 = vmatpush1.bf16.msra.mxu0 %v119
    %140 = vmatprep.subr.bf16.mxu0 0
    %141 = vmatpush1.bf16.msra.mxu0 %v120
    %142 = vmatprep.subr.bf16.mxu0 0
    %143 = vmatpush1.bf16.msra.mxu0 %v121
    %144 = vmatprep.subr.bf16.mxu0 0
    %145 = vmatpush1.bf16.msra.mxu0 %v122
    %146 = vmatprep.subr.bf16.mxu0 0
    %147 = vmatpush1.bf16.msra.mxu0 %v123
    %148 = vmatprep.subr.bf16.mxu0 0
    %149 = vmatpush1.bf16.msra.mxu0 0
    %150 = vmatprep.subr.bf16.mxu0 0
    %151 = vmatpush1.bf16.msra.mxu0 0
    %152 = vmatprep.subr.bf16.mxu0 0
    %153 = vmatpush1.bf16.msra.mxu0 0
    %154 = vmatprep.subr.bf16.mxu0 0
    %155 = vmatpush1.bf16.msra.mxu0 0
    %156 = vmatprep.subr.bf16.mxu0 0
    %157 = vmatpush1.bf16.msra.mxu0 0
    %158 = vmatprep.subr.bf16.mxu0 0
    %159 = vmatpush1.bf16.msra.mxu0 0
    %160 = vmatprep.subr.bf16.mxu0 0
    %161 = vmatpush1.bf16.msra.mxu0 0
    %162 = vmatprep.subr.bf16.mxu0 0
    %163 = vmatpush1.bf16.msra.mxu0 0
    %164 = vmatprep.mubr.bf16.mxu0 0
    %165 = vmatmul.mubr.bf16.gmra.mrb[0].mxu0 %v82
    %v166 = vpop.f32.mrb[0].mxu0
    %v167 = vadd.f32 %v77, %v166
    %v168 = vpop.f32.mrb[0].mxu0
    %v169 = vpop.f32.mrb[0].mxu0
    %v170 = vadd.f32 %v77, %v169
    %v171 = vpop.f32.mrb[0].mxu0
    %172 = vdwg.mxu0
    %v173 = vmax.f32 %v167, 0.0
    %v174 = vmax.f32 %v170, 0.0
    %v175 = vpack.c.bf16 %v174, %v173
    %s176 = scalar_lea.vmem [#allocation5], 64
    %v177 = vld [vmem:[%s176] sm:$0xf]
    %v178 = vld [vmem:[%s176 + $0x4] sm:$0xf]
    %v179 = vld [vmem:[%s176 + $0x8] sm:$0xf]
    %v180 = vld [vmem:[%s176 + $0xc] sm:$0xf]
    %v181 = vld [vmem:[%s176 + $0x10] sm:$0xf]
    %v182 = vld [vmem:[%s176 + $0x14] sm:$0xf]
    %v183 = vld [vmem:[%s176 + $0x18] sm:$0xf]
    %v184 = vld [vmem:[%s176 + $0x1c] sm:$0xf]
    %v185 = vld [vmem:[%s176 + $0x20] sm:$0xf]
    %v186 = vld [vmem:[%s176 + $0x24] sm:$0xf]
    %v187 = vld [vmem:[%s176 + $0x28] sm:$0xf]
    %v188 = vld [vmem:[%s176 + $0x2c] sm:$0xf]
    %v189 = vld [vmem:[%s176 + $0x30] sm:$0xf]
    %v190 = vld [vmem:[%s176 + $0x34] sm:$0xf]
    %v191 = vld [vmem:[%s176 + $0x38] sm:$0xf]
    %v192 = vld [vmem:[%s176 + $0x3c] sm:$0xf]
    %v193 = vld [vmem:[#allocation7 + $0x1] sm:$0x1]
    %v194 = vlaneseq
    %v195 = vshrl.u32 %v194, 7
    %v196 = vsub.s32 0, %v195
    %v197 = vrot.slane %v193, %v196
    %v214 = vunpack.c.l.b16 %v177
    %v215 = vunpack.c.l.b16 %v178
    %v216 = vunpack.c.l.b16 %v179
    %v217 = vunpack.c.l.b16 %v180
    %v218 = vunpack.c.l.b16 %v181
    %v219 = vunpack.c.l.b16 %v182
    %v220 = vunpack.c.l.b16 %v183
    %v221 = vunpack.c.l.b16 %v184
    %v222 = vunpack.c.l.b16 %v185
    %v223 = vunpack.c.l.b16 %v186
    %v224 = vunpack.c.l.b16 %v187
    %v225 = vunpack.c.l.b16 %v188
    %v226 = vunpack.c.l.b16 %v189
    %v227 = vunpack.c.l.b16 %v190
    %v228 = vunpack.c.l.b16 %v191
    %v229 = vunpack.c.l.b16 %v192
    %v230 = vpack.c.b16 %v215, %v214
    %v231 = vpack.c.b16 %v217, %v216
    %v232 = vpack.c.b16 %v219, %v218
    %v233 = vpack.c.b16 %v221, %v220
    %v234 = vpack.c.b16 %v223, %v222
    %v235 = vpack.c.b16 %v225, %v224
    %v236 = vpack.c.b16 %v227, %v226
    %v237 = vpack.c.b16 %v229, %v228
    %246 = vmatprep.subr.bf16.mxu0 0
    %247 = vmatpush1.bf16.msra.mxu0 %v230
    %248 = vmatprep.subr.bf16.mxu0 0
    %249 = vmatpush1.bf16.msra.mxu0 %v231
    %250 = vmatprep.subr.bf16.mxu0 0
    %251 = vmatpush1.bf16.msra.mxu0 %v232
    %252 = vmatprep.subr.bf16.mxu0 0
    %253 = vmatpush1.bf16.msra.mxu0 %v233
    %254 = vmatprep.subr.bf16.mxu0 0
    %255 = vmatpush1.bf16.msra.mxu0 %v234
    %256 = vmatprep.subr.bf16.mxu0 0
    %257 = vmatpush1.bf16.msra.mxu0 %v235
    %258 = vmatprep.subr.bf16.mxu0 0
    %259 = vmatpush1.bf16.msra.mxu0 %v236
    %260 = vmatprep.subr.bf16.mxu0 0
    %261 = vmatpush1.bf16.msra.mxu0 %v237
    %262 = vmatprep.subr.bf16.mxu0 0
    %263 = vmatpush1.bf16.msra.mxu0 0
    %264 = vmatprep.subr.bf16.mxu0 0
    %265 = vmatpush1.bf16.msra.mxu0 0
    %266 = vmatprep.subr.bf16.mxu0 0
    %267 = vmatpush1.bf16.msra.mxu0 0
    %268 = vmatprep.subr.bf16.mxu0 0
    %269 = vmatpush1.bf16.msra.mxu0 0
    %270 = vmatprep.subr.bf16.mxu0 0
    %271 = vmatpush1.bf16.msra.mxu0 0
    %272 = vmatprep.subr.bf16.mxu0 0
    %273 = vmatpush1.bf16.msra.mxu0 0
    %274 = vmatprep.subr.bf16.mxu0 0
    %275 = vmatpush1.bf16.msra.mxu0 0
    %276 = vmatprep.subr.bf16.mxu0 0
    %277 = vmatpush1.bf16.msra.mxu0 0
    %278 = vmatprep.mubr.bf16.mxu0 0
    %279 = vmatmul.mubr.bf16.gmra.mrb[0].mxu0 %v175
    %v280 = vpop.f32.mrb[0].mxu0
    %v281 = vadd.f32 %v197, %v280
    %v282 = vpop.f32.mrb[0].mxu0
    %v283 = vpop.f32.mrb[0].mxu0
    %v284 = vadd.f32 %v197, %v283
    %v285 = vpop.f32.mrb[0].mxu0
    %286 = vdwg.mxu0
    %v287 = vmax.f32 %v281, 0.0
    %v288 = vmax.f32 %v284, 0.0
    %v289 = vpack.c.bf16 %v288, %v287
    %s290 = scalar_lea.vmem [#allocation5], 128
    %v291 = vld [vmem:[%s290] sm:$0xf]
    %v292 = vld [vmem:[%s290 + $0x4] sm:$0xf]
    %v293 = vld [vmem:[%s290 + $0x8] sm:$0xf]
    %v294 = vld [vmem:[%s290 + $0xc] sm:$0xf]
    %v295 = vld [vmem:[%s290 + $0x10] sm:$0xf]
    %v296 = vld [vmem:[%s290 + $0x14] sm:$0xf]
    %v297 = vld [vmem:[%s290 + $0x18] sm:$0xf]
    %v298 = vld [vmem:[%s290 + $0x1c] sm:$0xf]
    %v299 = vld [vmem:[%s290 + $0x20] sm:$0xf]
    %v300 = vld [vmem:[%s290 + $0x24] sm:$0xf]
    %v301 = vld [vmem:[%s290 + $0x28] sm:$0xf]
    %v302 = vld [vmem:[%s290 + $0x2c] sm:$0xf]
    %v303 = vld [vmem:[%s290 + $0x30] sm:$0xf]
    %v304 = vld [vmem:[%s290 + $0x34] sm:$0xf]
    %v305 = vld [vmem:[%s290 + $0x38] sm:$0xf]
    %v306 = vld [vmem:[%s290 + $0x3c] sm:$0xf]
    %v307 = vld [vmem:[#allocation7 + $0x2] sm:$0x1]
    %v308 = vlaneseq
    %v309 = vshrl.u32 %v308, 7
    %v310 = vsub.s32 0, %v309
    %v311 = vrot.slane %v307, %v310
    %v328 = vunpack.c.l.b16 %v291
    %v329 = vunpack.c.l.b16 %v292
    %v330 = vunpack.c.l.b16 %v293
    %v331 = vunpack.c.l.b16 %v294
    %v332 = vunpack.c.l.b16 %v295
    %v333 = vunpack.c.l.b16 %v296
    %v334 = vunpack.c.l.b16 %v297
    %v335 = vunpack.c.l.b16 %v298
    %v336 = vunpack.c.l.b16 %v299
    %v337 = vunpack.c.l.b16 %v300
    %v338 = vunpack.c.l.b16 %v301
    %v339 = vunpack.c.l.b16 %v302
    %v340 = vunpack.c.l.b16 %v303
    %v341 = vunpack.c.l.b16 %v304
    %v342 = vunpack.c.l.b16 %v305
    %v343 = vunpack.c.l.b16 %v306
    %v344 = vpack.c.b16 %v329, %v328
    %v345 = vpack.c.b16 %v331, %v330
    %v346 = vpack.c.b16 %v333, %v332
    %v347 = vpack.c.b16 %v335, %v334
    %v348 = vpack.c.b16 %v337, %v336
    %v349 = vpack.c.b16 %v339, %v338
    %v350 = vpack.c.b16 %v341, %v340
    %v351 = vpack.c.b16 %v343, %v342
    %360 = vmatprep.subr.bf16.mxu0 0
    %361 = vmatpush1.bf16.msra.mxu0 %v344
    %362 = vmatprep.subr.bf16.mxu0 0
    %363 = vmatpush1.bf16.msra.mxu0 %v345
    %364 = vmatprep.subr.bf16.mxu0 0
    %365 = vmatpush1.bf16.msra.mxu0 %v346
    %366 = vmatprep.subr.bf16.mxu0 0
    %367 = vmatpush1.bf16.msra.mxu0 %v347
    %368 = vmatprep.subr.bf16.mxu0 0
    %369 = vmatpush1.bf16.msra.mxu0 %v348
    %370 = vmatprep.subr.bf16.mxu0 0
    %371 = vmatpush1.bf16.msra.mxu0 %v349
    %372 = vmatprep.subr.bf16.mxu0 0
    %373 = vmatpush1.bf16.msra.mxu0 %v350
    %374 = vmatprep.subr.bf16.mxu0 0
    %375 = vmatpush1.bf16.msra.mxu0 %v351
    %376 = vmatprep.subr.bf16.mxu0 0
    %377 = vmatpush1.bf16.msra.mxu0 0
    %378 = vmatprep.subr.bf16.mxu0 0
    %379 = vmatpush1.bf16.msra.mxu0 0
    %380 = vmatprep.subr.bf16.mxu0 0
    %381 = vmatpush1.bf16.msra.mxu0 0
    %382 = vmatprep.subr.bf16.mxu0 0
    %383 = vmatpush1.bf16.msra.mxu0 0
    %384 = vmatprep.subr.bf16.mxu0 0
    %385 = vmatpush1.bf16.msra.mxu0 0
    %386 = vmatprep.subr.bf16.mxu0 0
    %387 = vmatpush1.bf16.msra.mxu0 0
    %388 = vmatprep.subr.bf16.mxu0 0
    %389 = vmatpush1.bf16.msra.mxu0 0
    %390 = vmatprep.subr.bf16.mxu0 0
    %391 = vmatpush1.bf16.msra.mxu0 0
    %392 = vmatprep.mubr.bf16.mxu0 0
    %393 = vmatmul.mubr.bf16.gmra.mrb[0].mxu0 %v289
    %v394 = vpop.f32.mrb[0].mxu0
    %v395 = vadd.f32 %v311, %v394
    %v396 = vpop.f32.mrb[0].mxu0
    %v397 = vpop.f32.mrb[0].mxu0
    %v398 = vadd.f32 %v311, %v397
    %v399 = vpop.f32.mrb[0].mxu0
    %400 = vdwg.mxu0
    %v401 = vmax.f32 %v395, 0.0
    %v402 = vmax.f32 %v398, 0.0
    %v403 = vpack.c.bf16 %v402, %v401
    %s404 = scalar_lea.vmem [#allocation5], 192
    %v405 = vld [vmem:[%s404] sm:$0xf]
    %v406 = vld [vmem:[%s404 + $0x4] sm:$0xf]
    %v407 = vld [vmem:[%s404 + $0x8] sm:$0xf]
    %v408 = vld [vmem:[%s404 + $0xc] sm:$0xf]
    %v409 = vld [vmem:[%s404 + $0x10] sm:$0xf]
    %v410 = vld [vmem:[%s404 + $0x14] sm:$0xf]
    %v411 = vld [vmem:[%s404 + $0x18] sm:$0xf]
    %v412 = vld [vmem:[%s404 + $0x1c] sm:$0xf]
    %v413 = vld [vmem:[%s404 + $0x20] sm:$0xf]
    %v414 = vld [vmem:[%s404 + $0x24] sm:$0xf]
    %v415 = vld [vmem:[%s404 + $0x28] sm:$0xf]
    %v416 = vld [vmem:[%s404 + $0x2c] sm:$0xf]
    %v417 = vld [vmem:[%s404 + $0x30] sm:$0xf]
    %v418 = vld [vmem:[%s404 + $0x34] sm:$0xf]
    %v419 = vld [vmem:[%s404 + $0x38] sm:$0xf]
    %v420 = vld [vmem:[%s404 + $0x3c] sm:$0xf]
    %v421 = vld [vmem:[#allocation7 + $0x3] sm:$0x1]
    %v422 = vlaneseq
    %v423 = vshrl.u32 %v422, 7
    %v424 = vsub.s32 0, %v423
    %v425 = vrot.slane %v421, %v424
    %v442 = vunpack.c.l.b16 %v405
    %v443 = vunpack.c.l.b16 %v406
    %v444 = vunpack.c.l.b16 %v407
    %v445 = vunpack.c.l.b16 %v408
    %v446 = vunpack.c.l.b16 %v409
    %v447 = vunpack.c.l.b16 %v410
    %v448 = vunpack.c.l.b16 %v411
    %v449 = vunpack.c.l.b16 %v412
    %v450 = vunpack.c.l.b16 %v413
    %v451 = vunpack.c.l.b16 %v414
    %v452 = vunpack.c.l.b16 %v415
    %v453 = vunpack.c.l.b16 %v416
    %v454 = vunpack.c.l.b16 %v417
    %v455 = vunpack.c.l.b16 %v418
    %v456 = vunpack.c.l.b16 %v419
    %v457 = vunpack.c.l.b16 %v420
    %v458 = vpack.c.b16 %v443, %v442
    %v459 = vpack.c.b16 %v445, %v444
    %v460 = vpack.c.b16 %v447, %v446
    %v461 = vpack.c.b16 %v449, %v448
    %v462 = vpack.c.b16 %v451, %v450
    %v463 = vpack.c.b16 %v453, %v452
    %v464 = vpack.c.b16 %v455, %v454
    %v465 = vpack.c.b16 %v457, %v456
    %474 = vmatprep.subr.bf16.mxu0 0
    %475 = vmatpush1.bf16.msra.mxu0 %v458
    %476 = vmatprep.subr.bf16.mxu0 0
    %477 = vmatpush1.bf16.msra.mxu0 %v459
    %478 = vmatprep.subr.bf16.mxu0 0
    %479 = vmatpush1.bf16.msra.mxu0 %v460
    %480 = vmatprep.subr.bf16.mxu0 0
    %481 = vmatpush1.bf16.msra.mxu0 %v461
    %482 = vmatprep.subr.bf16.mxu0 0
    %483 = vmatpush1.bf16.msra.mxu0 %v462
    %484 = vmatprep.subr.bf16.mxu0 0
    %485 = vmatpush1.bf16.msra.mxu0 %v463
    %486 = vmatprep.subr.bf16.mxu0 0
    %487 = vmatpush1.bf16.msra.mxu0 %v464
    %488 = vmatprep.subr.bf16.mxu0 0
    %489 = vmatpush1.bf16.msra.mxu0 %v465
    %490 = vmatprep.subr.bf16.mxu0 0
    %491 = vmatpush1.bf16.msra.mxu0 0
    %492 = vmatprep.subr.bf16.mxu0 0
    %493 = vmatpush1.bf16.msra.mxu0 0
    %494 = vmatprep.subr.bf16.mxu0 0
    %495 = vmatpush1.bf16.msra.mxu0 0
    %496 = vmatprep.subr.bf16.mxu0 0
    %497 = vmatpush1.bf16.msra.mxu0 0
    %498 = vmatprep.subr.bf16.mxu0 0
    %499 = vmatpush1.bf16.msra.mxu0 0
    %500 = vmatprep.subr.bf16.mxu0 0
    %501 = vmatpush1.bf16.msra.mxu0 0
    %502 = vmatprep.subr.bf16.mxu0 0
    %503 = vmatpush1.bf16.msra.mxu0 0
    %504 = vmatprep.subr.bf16.mxu0 0
    %505 = vmatpush1.bf16.msra.mxu0 0
    %506 = vmatprep.mubr.bf16.mxu0 0
    %507 = vmatmul.mubr.bf16.gmra.mrb[0].mxu0 %v403
    %v508 = vpop.f32.mrb[0].mxu0
    %v509 = vadd.f32 %v425, %v508
    %v510 = vpop.f32.mrb[0].mxu0
    %v511 = vpop.f32.mrb[0].mxu0
    %v512 = vadd.f32 %v425, %v511
    %v513 = vpop.f32.mrb[0].mxu0
    %514 = vdwg.mxu0
    %v515 = vmax.f32 %v509, 0.0
    %v516 = vmax.f32 %v512, 0.0
    %v517 = vpack.c.bf16 %v516, %v515
    %s518 = scalar_lea.vmem [#allocation5], 256
    %v519 = vld [vmem:[%s518] sm:$0xf]
    %v520 = vld [vmem:[%s518 + $0x4] sm:$0xf]
    %v521 = vld [vmem:[%s518 + $0x8] sm:$0xf]
    %v522 = vld [vmem:[%s518 + $0xc] sm:$0xf]
    %v523 = vld [vmem:[%s518 + $0x10] sm:$0xf]
    %v524 = vld [vmem:[%s518 + $0x14] sm:$0xf]
    %v525 = vld [vmem:[%s518 + $0x18] sm:$0xf]
    %v526 = vld [vmem:[%s518 + $0x1c] sm:$0xf]
    %v527 = vld [vmem:[%s518 + $0x20] sm:$0xf]
    %v528 = vld [vmem:[%s518 + $0x24] sm:$0xf]
    %v529 = vld [vmem:[%s518 + $0x28] sm:$0xf]
    %v530 = vld [vmem:[%s518 + $0x2c] sm:$0xf]
    %v531 = vld [vmem:[%s518 + $0x30] sm:$0xf]
    %v532 = vld [vmem:[%s518 + $0x34] sm:$0xf]
    %v533 = vld [vmem:[%s518 + $0x38] sm:$0xf]
    %v534 = vld [vmem:[%s518 + $0x3c] sm:$0xf]
    %v535 = vld [vmem:[#allocation7 + $0x4] sm:$0x1]
    %v536 = vlaneseq
    %v537 = vshrl.u32 %v536, 7
    %v538 = vsub.s32 0, %v537
    %v539 = vrot.slane %v535, %v538
    %v556 = vunpack.c.l.b16 %v519
    %v557 = vunpack.c.l.b16 %v520
    %v558 = vunpack.c.l.b16 %v521
    %v559 = vunpack.c.l.b16 %v522
    %v560 = vunpack.c.l.b16 %v523
    %v561 = vunpack.c.l.b16 %v524
    %v562 = vunpack.c.l.b16 %v525
    %v563 = vunpack.c.l.b16 %v526
    %v564 = vunpack.c.l.b16 %v527
    %v565 = vunpack.c.l.b16 %v528
    %v566 = vunpack.c.l.b16 %v529
    %v567 = vunpack.c.l.b16 %v530
    %v568 = vunpack.c.l.b16 %v531
    %v569 = vunpack.c.l.b16 %v532
    %v570 = vunpack.c.l.b16 %v533
    %v571 = vunpack.c.l.b16 %v534
    %v572 = vpack.c.b16 %v557, %v556
    %v573 = vpack.c.b16 %v559, %v558
    %v574 = vpack.c.b16 %v561, %v560
    %v575 = vpack.c.b16 %v563, %v562
    %v576 = vpack.c.b16 %v565, %v564
    %v577 = vpack.c.b16 %v567, %v566
    %v578 = vpack.c.b16 %v569, %v568
    %v579 = vpack.c.b16 %v571, %v570
    %588 = vmatprep.subr.bf16.mxu0 0
    %589 = vmatpush1.bf16.msra.mxu0 %v572
    %590 = vmatprep.subr.bf16.mxu0 0
    %591 = vmatpush1.bf16.msra.mxu0 %v573
    %592 = vmatprep.subr.bf16.mxu0 0
    %593 = vmatpush1.bf16.msra.mxu0 %v574
    %594 = vmatprep.subr.bf16.mxu0 0
    %595 = vmatpush1.bf16.msra.mxu0 %v575
    %596 = vmatprep.subr.bf16.mxu0 0
    %597 = vmatpush1.bf16.msra.mxu0 %v576
    %598 = vmatprep.subr.bf16.mxu0 0
    %599 = vmatpush1.bf16.msra.mxu0 %v577
    %600 = vmatprep.subr.bf16.mxu0 0
    %601 = vmatpush1.bf16.msra.mxu0 %v578
    %602 = vmatprep.subr.bf16.mxu0 0
    %603 = vmatpush1.bf16.msra.mxu0 %v579
    %604 = vmatprep.subr.bf16.mxu0 0
    %605 = vmatpush1.bf16.msra.mxu0 0
    %606 = vmatprep.subr.bf16.mxu0 0
    %607 = vmatpush1.bf16.msra.mxu0 0
    %608 = vmatprep.subr.bf16.mxu0 0
    %609 = vmatpush1.bf16.msra.mxu0 0
    %610 = vmatprep.subr.bf16.mxu0 0
    %611 = vmatpush1.bf16.msra.mxu0 0
    %612 = vmatprep.subr.bf16.mxu0 0
    %613 = vmatpush1.bf16.msra.mxu0 0
    %614 = vmatprep.subr.bf16.mxu0 0
    %615 = vmatpush1.bf16.msra.mxu0 0
    %616 = vmatprep.subr.bf16.mxu0 0
    %617 = vmatpush1.bf16.msra.mxu0 0
    %618 = vmatprep.subr.bf16.mxu0 0
    %619 = vmatpush1.bf16.msra.mxu0 0
    %620 = vmatprep.mubr.bf16.mxu0 0
    %621 = vmatmul.mubr.bf16.gmra.mrb[0].mxu0 %v517
    %v622 = vpop.f32.mrb[0].mxu0
    %v623 = vadd.f32 %v539, %v622
    %v624 = vpop.f32.mrb[0].mxu0
    %v625 = vpop.f32.mrb[0].mxu0
    %v626 = vadd.f32 %v539, %v625
    %v627 = vpop.f32.mrb[0].mxu0
    %628 = vdwg.mxu0
    %v629 = vmax.f32 %v623, 0.0
    %v630 = vmax.f32 %v626, 0.0
    %v631 = vpack.c.bf16 %v630, %v629
    %s632 = scalar_lea.vmem [#allocation5], 320
    %v633 = vld [vmem:[%s632] sm:$0xf]
    %v634 = vld [vmem:[%s632 + $0x4] sm:$0xf]
    %v635 = vld [vmem:[%s632 + $0x8] sm:$0xf]
    %v636 = vld [vmem:[%s632 + $0xc] sm:$0xf]
    %v637 = vld [vmem:[%s632 + $0x10] sm:$0xf]
    %v638 = vld [vmem:[%s632 + $0x14] sm:$0xf]
    %v639 = vld [vmem:[%s632 + $0x18] sm:$0xf]
    %v640 = vld [vmem:[%s632 + $0x1c] sm:$0xf]
    %v641 = vld [vmem:[%s632 + $0x20] sm:$0xf]
    %v642 = vld [vmem:[%s632 + $0x24] sm:$0xf]
    %v643 = vld [vmem:[%s632 + $0x28] sm:$0xf]
    %v644 = vld [vmem:[%s632 + $0x2c] sm:$0xf]
    %v645 = vld [vmem:[%s632 + $0x30] sm:$0xf]
    %v646 = vld [vmem:[%s632 + $0x34] sm:$0xf]
    %v647 = vld [vmem:[%s632 + $0x38] sm:$0xf]
    %v648 = vld [vmem:[%s632 + $0x3c] sm:$0xf]
    %v649 = vld [vmem:[#allocation7 + $0x5] sm:$0x1]
    %v650 = vlaneseq
    %v651 = vshrl.u32 %v650, 7
    %v652 = vsub.s32 0, %v651
    %v653 = vrot.slane %v649, %v652
    %v670 = vunpack.c.l.b16 %v633
    %v671 = vunpack.c.l.b16 %v634
    %v672 = vunpack.c.l.b16 %v635
    %v673 = vunpack.c.l.b16 %v636
    %v674 = vunpack.c.l.b16 %v637
    %v675 = vunpack.c.l.b16 %v638
    %v676 = vunpack.c.l.b16 %v639
    %v677 = vunpack.c.l.b16 %v640
    %v678 = vunpack.c.l.b16 %v641
    %v679 = vunpack.c.l.b16 %v642
    %v680 = vunpack.c.l.b16 %v643
    %v681 = vunpack.c.l.b16 %v644
    %v682 = vunpack.c.l.b16 %v645
    %v683 = vunpack.c.l.b16 %v646
    %v684 = vunpack.c.l.b16 %v647
    %v685 = vunpack.c.l.b16 %v648
    %v686 = vpack.c.b16 %v671, %v670
    %v687 = vpack.c.b16 %v673, %v672
    %v688 = vpack.c.b16 %v675, %v674
    %v689 = vpack.c.b16 %v677, %v676
    %v690 = vpack.c.b16 %v679, %v678
    %v691 = vpack.c.b16 %v681, %v680
    %v692 = vpack.c.b16 %v683, %v682
    %v693 = vpack.c.b16 %v685, %v684
    %702 = vmatprep.subr.bf16.mxu0 0
    %703 = vmatpush1.bf16.msra.mxu0 %v686
    %704 = vmatprep.subr.bf16.mxu0 0
    %705 = vmatpush1.bf16.msra.mxu0 %v687
    %706 = vmatprep.subr.bf16.mxu0 0
    %707 = vmatpush1.bf16.msra.mxu0 %v688
    %708 = vmatprep.subr.bf16.mxu0 0
    %709 = vmatpush1.bf16.msra.mxu0 %v689
    %710 = vmatprep.subr.bf16.mxu0 0
    %711 = vmatpush1.bf16.msra.mxu0 %v690
    %712 = vmatprep.subr.bf16.mxu0 0
    %713 = vmatpush1.bf16.msra.mxu0 %v691
    %714 = vmatprep.subr.bf16.mxu0 0
    %715 = vmatpush1.bf16.msra.mxu0 %v692
    %716 = vmatprep.subr.bf16.mxu0 0
    %717 = vmatpush1.bf16.msra.mxu0 %v693
    %718 = vmatprep.subr.bf16.mxu0 0
    %719 = vmatpush1.bf16.msra.mxu0 0
    %720 = vmatprep.subr.bf16.mxu0 0
    %721 = vmatpush1.bf16.msra.mxu0 0
    %722 = vmatprep.subr.bf16.mxu0 0
    %723 = vmatpush1.bf16.msra.mxu0 0
    %724 = vmatprep.subr.bf16.mxu0 0
    %725 = vmatpush1.bf16.msra.mxu0 0
    %726 = vmatprep.subr.bf16.mxu0 0
    %727 = vmatpush1.bf16.msra.mxu0 0
    %728 = vmatprep.subr.bf16.mxu0 0
    %729 = vmatpush1.bf16.msra.mxu0 0
    %730 = vmatprep.subr.bf16.mxu0 0
    %731 = vmatpush1.bf16.msra.mxu0 0
    %732 = vmatprep.subr.bf16.mxu0 0
    %733 = vmatpush1.bf16.msra.mxu0 0
    %734 = vmatprep.mubr.bf16.mxu0 0
    %735 = vmatmul.mubr.bf16.gmra.mrb[0].mxu0 %v631
    %v736 = vpop.f32.mrb[0].mxu0
    %v737 = vadd.f32 %v653, %v736
    %v738 = vpop.f32.mrb[0].mxu0
    %v739 = vpop.f32.mrb[0].mxu0
    %v740 = vadd.f32 %v653, %v739
    %v741 = vpop.f32.mrb[0].mxu0
    %742 = vdwg.mxu0
    %v743 = vmax.f32 %v737, 0.0
    %v744 = vmax.f32 %v740, 0.0
    %v745 = vpack.c.bf16 %v744, %v743
    %s746 = scalar_lea.vmem [#allocation5], 384
    %v747 = vld [vmem:[%s746] sm:$0xf]
    %v748 = vld [vmem:[%s746 + $0x4] sm:$0xf]
    %v749 = vld [vmem:[%s746 + $0x8] sm:$0xf]
    %v750 = vld [vmem:[%s746 + $0xc] sm:$0xf]
    %v751 = vld [vmem:[%s746 + $0x10] sm:$0xf]
    %v752 = vld [vmem:[%s746 + $0x14] sm:$0xf]
    %v753 = vld [vmem:[%s746 + $0x18] sm:$0xf]
    %v754 = vld [vmem:[%s746 + $0x1c] sm:$0xf]
    %v755 = vld [vmem:[%s746 + $0x20] sm:$0xf]
    %v756 = vld [vmem:[%s746 + $0x24] sm:$0xf]
    %v757 = vld [vmem:[%s746 + $0x28] sm:$0xf]
    %v758 = vld [vmem:[%s746 + $0x2c] sm:$0xf]
    %v759 = vld [vmem:[%s746 + $0x30] sm:$0xf]
    %v760 = vld [vmem:[%s746 + $0x34] sm:$0xf]
    %v761 = vld [vmem:[%s746 + $0x38] sm:$0xf]
    %v762 = vld [vmem:[%s746 + $0x3c] sm:$0xf]
    %v763 = vld [vmem:[#allocation7 + $0x6] sm:$0x1]
    %v764 = vlaneseq
    %v765 = vshrl.u32 %v764, 7
    %v766 = vsub.s32 0, %v765
    %v767 = vrot.slane %v763, %v766
    %v784 = vunpack.c.l.b16 %v747
    %v785 = vunpack.c.l.b16 %v748
    %v786 = vunpack.c.l.b16 %v749
    %v787 = vunpack.c.l.b16 %v750
    %v788 = vunpack.c.l.b16 %v751
    %v789 = vunpack.c.l.b16 %v752
    %v790 = vunpack.c.l.b16 %v753
    %v791 = vunpack.c.l.b16 %v754
    %v792 = vunpack.c.l.b16 %v755
    %v793 = vunpack.c.l.b16 %v756
    %v794 = vunpack.c.l.b16 %v757
    %v795 = vunpack.c.l.b16 %v758
    %v796 = vunpack.c.l.b16 %v759
    %v797 = vunpack.c.l.b16 %v760
    %v798 = vunpack.c.l.b16 %v761
    %v799 = vunpack.c.l.b16 %v762
    %v800 = vpack.c.b16 %v785, %v784
    %v801 = vpack.c.b16 %v787, %v786
    %v802 = vpack.c.b16 %v789, %v788
    %v803 = vpack.c.b16 %v791, %v790
    %v804 = vpack.c.b16 %v793, %v792
    %v805 = vpack.c.b16 %v795, %v794
    %v806 = vpack.c.b16 %v797, %v796
    %v807 = vpack.c.b16 %v799, %v798
    %816 = vmatprep.subr.bf16.mxu0 0
    %817 = vmatpush1.bf16.msra.mxu0 %v800
    %818 = vmatprep.subr.bf16.mxu0 0
    %819 = vmatpush1.bf16.msra.mxu0 %v801
    %820 = vmatprep.subr.bf16.mxu0 0
    %821 = vmatpush1.bf16.msra.mxu0 %v802
    %822 = vmatprep.subr.bf16.mxu0 0
    %823 = vmatpush1.bf16.msra.mxu0 %v803
    %824 = vmatprep.subr.bf16.mxu0 0
    %825 = vmatpush1.bf16.msra.mxu0 %v804
    %826 = vmatprep.subr.bf16.mxu0 0
    %827 = vmatpush1.bf16.msra.mxu0 %v805
    %828 = vmatprep.subr.bf16.mxu0 0
    %829 = vmatpush1.bf16.msra.mxu0 %v806
    %830 = vmatprep.subr.bf16.mxu0 0
    %831 = vmatpush1.bf16.msra.mxu0 %v807
    %832 = vmatprep.subr.bf16.mxu0 0
    %833 = vmatpush1.bf16.msra.mxu0 0
    %834 = vmatprep.subr.bf16.mxu0 0
    %835 = vmatpush1.bf16.msra.mxu0 0
    %836 = vmatprep.subr.bf16.mxu0 0
    %837 = vmatpush1.bf16.msra.mxu0 0
    %838 = vmatprep.subr.bf16.mxu0 0
    %839 = vmatpush1.bf16.msra.mxu0 0
    %840 = vmatprep.subr.bf16.mxu0 0
    %841 = vmatpush1.bf16.msra.mxu0 0
    %842 = vmatprep.subr.bf16.mxu0 0
    %843 = vmatpush1.bf16.msra.mxu0 0
    %844 = vmatprep.subr.bf16.mxu0 0
    %845 = vmatpush1.bf16.msra.mxu0 0
    %846 = vmatprep.subr.bf16.mxu0 0
    %847 = vmatpush1.bf16.msra.mxu0 0
    %848 = vmatprep.mubr.bf16.mxu0 0
    %849 = vmatmul.mubr.bf16.gmra.mrb[0].mxu0 %v745
    %v850 = vpop.f32.mrb[0].mxu0
    %v851 = vadd.f32 %v767, %v850
    %v852 = vpop.f32.mrb[0].mxu0
    %v853 = vpop.f32.mrb[0].mxu0
    %v854 = vadd.f32 %v767, %v853
    %v855 = vpop.f32.mrb[0].mxu0
    %856 = vdwg.mxu0
    %857 = vmax.xlane.f32.xlu0 %v851
    %v858 = vpop.xlane.xlu0 %857
    %859 = vmax.xlane.f32.xlu0 %v854
    %v860 = vpop.xlane.xlu0 %859
    %v861 = vsub.f32 %v851, %v858
    %v862 = vsub.f32 %v854, %v860
    %v863 = vmul.f32 %v861, 1.442695
    %v864 = vpow.pop %v863
    %v865 = vmul.f32 %v862, 1.442695
    %v866 = vpow.pop %v865
    %867 = vadd.xlane.f32.xlu0 %v864
    %v868 = vpop.xlane.xlu0 %867
    %869 = vadd.xlane.f32.xlu0 %v866
    %v870 = vpop.xlane.xlu0 %869
    %v871 = vrcp.pop %v868
    %v872 = vmul.f32 %v864, %v871
    %v873 = vrcp.pop %v870
    %v874 = vmul.f32 %v866, %v873
    %v875 = vpack.c.bf16 %v874, %v872
    %v877 = vunpack.c.l.b16 %v875
    %v878 = vunpack.c.h.b16 %v875
    %v879 = vpack.c.b16 %v877, %v877
    %v880 = vpack.c.b16 %v878, %v878
    %883 = vst [vmem:[#allocation8] sm:$0xf] %v879
    %884 = vst [vmem:[#allocation8 + $0x4] sm:$0xf] %v880
    // Predicated region
    $region26: #{tpu_custom_call.1} parent=1 // pred_check
      _
    $region27: #{tpu_custom_call.1} parent=1 // pred_check_branch
      %886 = sbr.rel (0) target = $region29
    $region28: #{tpu_custom_call.1} parent=1 // pred_region
      %s888 = ssub.s32 128, 128
      %889 = vsyncadd [#allocation4], %s888
      %s890 = sshll.u32 [#allocation8], 4
      %s891 = int_to_ptr.vmem [resolvable:$true] %s890
      %896 = dma.vmem_to_hbm [thread:$0]  %s891, 128, %s3, [#allocation4], 64, 64, 4
    $region29: #{tpu_custom_call.1} parent=1 // pred_fallthru
      _
    // Predicated region
    $region30: #{tpu_custom_call.1} parent=1 // pred_check
      _
    $region31: #{tpu_custom_call.1} parent=1 // pred_check_branch
      %898 = sbr.rel (0) target = $region33
    $region32: #{tpu_custom_call.1} parent=1 // pred_region
      %899 = dma.done [#allocation4], 128
    $region33: #{tpu_custom_call.1} parent=1 // pred_fallthru
      _
    %900 = vsyncpa [#allocation3], 1
    %901 = vsyncpa [#allocation6], 1
    %902 = vsyncpa [#allocation4], 1

</llo_original>
